<compile_context>
chip_gen: v5e
topology: v5e:2x2
jax: 0.10.0
libtpu: 0.0.40
codegen_flags: <defaults>
</compile_context>

<pallas_src>
import math
from functools import partial

import numpy as np
import jax
import jax.numpy as jnp
from jax.experimental import pallas as pl
from jax.experimental.pallas import tpu as pltpu


# ------------------------- sincos positional embeddings (host, numpy) -------------------------
def get_1d_sincos_pos_embed_from_grid(embed_dim, pos):
    assert embed_dim % 2 == 0
    omega = np.arange(embed_dim // 2, dtype=np.float64)
    omega /= embed_dim / 2.0
    omega = 1.0 / 10000 ** omega
    pos = pos.reshape(-1)
    out = np.einsum('m,d->md', pos, omega)
    return np.concatenate([np.sin(out), np.cos(out)], axis=1)


def get_3d_sincos_pos_embed(embed_dim, grid_size, add_cls_token=False):
    assert embed_dim % 16 == 0
    t_size, h_size, w_size = grid_size
    w_embed_dim = embed_dim // 16 * 6
    h_embed_dim = embed_dim // 16 * 6
    t_embed_dim = embed_dim // 16 * 4
    w_pos = get_1d_sincos_pos_embed_from_grid(w_embed_dim, np.arange(w_size))
    h_pos = get_1d_sincos_pos_embed_from_grid(h_embed_dim, np.arange(h_size))
    t_pos = get_1d_sincos_pos_embed_from_grid(t_embed_dim, np.arange(t_size))
    w_pos = np.tile(w_pos, (t_size * h_size, 1))
    h_pos = np.tile(np.repeat(h_pos, w_size, axis=0), (t_size, 1))
    t_pos = np.repeat(t_pos, h_size * w_size, axis=0)
    pos = np.concatenate((w_pos, h_pos, t_pos), axis=1)
    if add_cls_token:
        pos = np.concatenate([np.zeros([1, embed_dim]), pos], axis=0)
    return pos


# ------------------------------ in-kernel math helpers ------------------------------
def _layernorm(x, w, b, eps):
    mu = jnp.mean(x, axis=-1, keepdims=True)
    var = jnp.mean(jnp.square(x - mu), axis=-1, keepdims=True)
    return (x - mu) * jax.lax.rsqrt(var + eps) * w + b


def _gelu_tanh(x):
    # tanh-approximate GELU (EUP tanh instead of a long erf polynomial on the VPU).
    # Max abs deviation from torch.nn.GELU() (exact erf) is ~3e-3.
    c = 0.7978845608028654  # sqrt(2/pi)
    return 0.5 * x * (1.0 + jnp.tanh(c * (x + 0.044715 * x * x * x)))


# ------------------------------ Pallas kernels ------------------------------
def _patch_embed_kernel(p_ref, w_ref, b_ref, o_ref):
    # p: (tile_m, P) f32 patch rows, w: (P, D) bf16 (resident), b: (1, D) f32
    o_ref[...] = (
        jnp.dot(p_ref[...].astype(jnp.bfloat16), w_ref[...],
                preferred_element_type=jnp.float32)
        + b_ref[...]
    )


def _encoder_kernel(x_ref, ln1w, ln1b, qkvw, qkvb, pwh, pb, ln2w, ln2b,
                    f1w, f1b, f2w, f2b, nw, nb, o_ref,
                    *, num_heads, head_dim, eps):
    """One (batch, layer) grid step of the fused transformer stack.

    grid = (B, depth); the output block index only depends on the batch axis, so the
    (S, D) activation stays resident in VMEM across the whole depth loop.  Per-layer
    weights are selected by the layer grid index through their BlockSpecs.
    """
    layer = pl.program_id(1)
    last = pl.num_programs(1) - 1
    D = num_heads * head_dim
    scale = head_dim ** -0.5

    # Layer 0: seed the resident activation block from the input tokens.
    @pl.when(layer == 0)
    def _():
        o_ref[0] = x_ref[0]

    x = o_ref[0]                                                  # (S, D) f32

    # ---------------- attention branch ----------------
    xn = _layernorm(x, ln1w[0], ln1b[0], eps)
    qkv = jnp.dot(xn.astype(jnp.bfloat16), qkvw[0],
                  preferred_element_type=jnp.float32) + qkvb[0]   # (S, 3D) f32

    pw_l = pwh[0]                                                 # (H, hd, D) bf16
    # Fold the output projection into the head loop: attn @ W_o == sum_h (a_h @ v_h) @ W_o[h]
    # -> no lane-concat, every projection matmul is D lanes wide.
    acc = x + pb[0]                                               # residual + proj bias
    for h in range(num_heads):
        q = qkv[:, h * head_dim:(h + 1) * head_dim].astype(jnp.bfloat16)
        k = qkv[:, D + h * head_dim:D + (h + 1) * head_dim].astype(jnp.bfloat16)
        v = qkv[:, 2 * D + h * head_dim:2 * D + (h + 1) * head_dim].astype(jnp.bfloat16)
        s = jax.lax.dot_general(q, k, (((1,), (1,)), ((), ())),
                                preferred_element_type=jnp.float32) * scale  # (S, S)
        s = s - jnp.max(s, axis=-1, keepdims=True)
        e = jnp.exp(s)
        a = e * pl.reciprocal(jnp.sum(e, axis=-1, keepdims=True), approx=True)
        o_h = jnp.dot(a.astype(jnp.bfloat16), v,
                      preferred_element_type=jnp.float32)          # (S, hd)
        acc = acc + jnp.dot(o_h.astype(jnp.bfloat16), pw_l[h],
                            preferred_element_type=jnp.float32)    # (S, D)
    x = acc

    # ---------------- MLP branch ----------------
    xn2 = _layernorm(x, ln2w[0], ln2b[0], eps)
    h1 = _gelu_tanh(jnp.dot(xn2.astype(jnp.bfloat16), f1w[0],
                            preferred_element_type=jnp.float32) + f1b[0])
    x = x + jnp.dot(h1.astype(jnp.bfloat16), f2w[0],
                    preferred_element_type=jnp.float32) + f2b[0]

    o_ref[0] = x

    # Final LayerNorm fused into the last layer step.
    @pl.when(layer == last)
    def _():
        o_ref[0] = _layernorm(x, nw[...], nb[...], eps)


# ------------------------------ parameter init / helpers ------------------------------
def _xavier_uniform(key, fan_in, fan_out):
    bound = math.sqrt(6.0 / (fan_in + fan_out))
    return jax.random.uniform(key, (fan_in, fan_out), jnp.float32, -bound, bound)


def _pick_row_tile(m):
    for t in (512, 256, 128, 64, 32, 16, 8):
        if m % t == 0:
            return t
    return m


class PrithviViTPallas:
    """Prithvi ViT encoder forward pass (coords_encoding=None, encoder_only=True)."""

    def __init__(self, img_size=16, patch_size=(1, 4, 4), num_frames=1, in_chans=4,
                 embed_dim=32, depth=2, num_heads=4, mlp_ratio=4.0, eps=1e-6,
                 key=jax.random.PRNGKey(0)):
        self.img_size = (img_size, img_size) if isinstance(img_size, int) else tuple(img_size)
        self.patch_size = patch_size
        self.in_chans = in_chans
        self.num_frames = num_frames
        self.embed_dim = embed_dim
        self.depth = depth
        self.num_heads = num_heads
        self.head_dim = embed_dim // num_heads
        self.hidden_dim = int(embed_dim * mlp_ratio)
        self.eps = eps
        self.input_size = (num_frames,) + self.img_size
        self.grid_size = [s // p for s, p in zip(self.input_size, patch_size)]
        self.num_patches = self.grid_size[0] * self.grid_size[1] * self.grid_size[2]

        D, H, hd, hidden = embed_dim, num_heads, self.head_dim, self.hidden_dim
        P = in_chans * patch_size[0] * patch_size[1] * patch_size[2]

        keys = jax.random.split(key, 4 + 4 * depth)
        ki = iter(keys)

        # patch embed (Conv3d, kernel == stride) -> (P, D) matmul weight (bf16 for the MXU)
        self.patch_w = _xavier_uniform(next(ki), P, D).astype(jnp.bfloat16)           # (P, D)
        kb = 1.0 / math.sqrt(P)
        self.patch_b = jax.random.uniform(next(ki), (1, D), jnp.float32, -kb, kb)

        # cls token ~ N(0, 0.02)
        self.cls_token = 0.02 * jax.random.normal(next(ki), (1, 1, D), jnp.float32)

        # fixed 3D sincos position embedding (with cls slot)
        pe = get_3d_sincos_pos_embed(D, self.grid_size, add_cls_token=True)
        self.pos_embed = jnp.asarray(pe, jnp.float32)[None]                            # (1, L+1, D)

        # ---- transformer blocks: weights stacked along a leading depth axis ----
        qkv_ws, proj_ws, fc1_ws, fc2_ws = [], [], [], []
        for _ in range(depth):
            k1, k2, k3, k4 = jax.random.split(next(ki), 4)
            qkv_ws.append(_xavier_uniform(k1, D, 3 * D))
            proj_ws.append(_xavier_uniform(k2, D, D))
            fc1_ws.append(_xavier_uniform(k3, D, hidden))
            fc2_ws.append(_xavier_uniform(k4, hidden, D))

        self.ln1_w = jnp.ones((depth, 1, D), jnp.float32)
        self.ln1_b = jnp.zeros((depth, 1, D), jnp.float32)
        self.qkv_w = jnp.stack(qkv_ws).astype(jnp.bfloat16)                            # (depth, D, 3D)
        self.qkv_b = jnp.zeros((depth, 1, 3 * D), jnp.float32)
        # projection weight split per head: (depth, H, hd, D) so the kernel can fold
        # the projection into the head loop without any lane concat.
        self.proj_w = jnp.stack(proj_ws).reshape(depth, H, hd, D).astype(jnp.bfloat16)
        self.proj_b = jnp.zeros((depth, 1, D), jnp.float32)
        self.ln2_w = jnp.ones((depth, 1, D), jnp.float32)
        self.ln2_b = jnp.zeros((depth, 1, D), jnp.float32)
        self.fc1_w = jnp.stack(fc1_ws).astype(jnp.bfloat16)                            # (depth, D, hidden)
        self.fc1_b = jnp.zeros((depth, 1, hidden), jnp.float32)
        self.fc2_w = jnp.stack(fc2_ws).astype(jnp.bfloat16)                            # (depth, hidden, D)
        self.fc2_b = jnp.zeros((depth, 1, D), jnp.float32)

        self.norm_w = jnp.ones((1, D), jnp.float32)
        self.norm_b = jnp.zeros((1, D), jnp.float32)

    # -------------------------- patch embedding (row-tiled) --------------------------
    def _patch_embed(self, x):
        B, C, T, H, W = x.shape
        pt, ph, pw = self.patch_size
        gt, gh, gw = T // pt, H // ph, W // pw
        M = B * gt * gh * gw
        P = C * pt * ph * pw
        D = self.embed_dim

        # patchify: (B, C, T, H, W) -> (M, P) with (C, pt, ph, pw) inner order (= Conv3d flatten)
        p = x.reshape(B, C, gt, pt, gh, ph, gw, pw)
        p = p.transpose(0, 2, 4, 6, 1, 3, 5, 7).reshape(M, P)

        tile_m = _pick_row_tile(M)
        out = pl.pallas_call(
            _patch_embed_kernel,
            out_shape=jax.ShapeDtypeStruct((M, D), jnp.float32),
            grid=(M // tile_m,),
            in_specs=[pl.BlockSpec((tile_m, P), lambda i: (i, 0)),
                      pl.BlockSpec((P, D), lambda i: (0, 0)),      # resident weight
                      pl.BlockSpec((1, D), lambda i: (0, 0))],
            out_specs=pl.BlockSpec((tile_m, D), lambda i: (i, 0)),
            compiler_params=pltpu.CompilerParams(
                dimension_semantics=("parallel",),
                vmem_limit_bytes=64 * 1024 * 1024),
        )(p, self.patch_w, self.patch_b)
        return out.reshape(B, gt * gh * gw, D)

    # -------------------------- fused transformer stack --------------------------
    def _run_encoder(self, h):
        B, S, D = h.shape
        weights = [self.ln1_w, self.ln1_b, self.qkv_w, self.qkv_b,
                   self.proj_w, self.proj_b, self.ln2_w, self.ln2_b,
                   self.fc1_w, self.fc1_b, self.fc2_w, self.fc2_b]
        # layer-indexed weight specs (note the default-arg capture of ndim)
        w_specs = [pl.BlockSpec((1,) + w.shape[1:],
                                lambda b, l, _n=w.ndim - 1: (l,) + (0,) * _n)
                   for w in weights]

        return pl.pallas_call(
            partial(_encoder_kernel, num_heads=self.num_heads,
                    head_dim=self.head_dim, eps=self.eps),
            out_shape=jax.ShapeDtypeStruct((B, S, D), jnp.float32),
            grid=(B, self.depth),
            in_specs=[pl.BlockSpec((1, S, D), lambda b, l: (b, 0, 0))] + w_specs
                     + [pl.BlockSpec((1, D), lambda b, l: (0, 0)),
                        pl.BlockSpec((1, D), lambda b, l: (0, 0))],
            out_specs=pl.BlockSpec((1, S, D), lambda b, l: (b, 0, 0)),
            compiler_params=pltpu.CompilerParams(
                dimension_semantics=("parallel", "arbitrary"),
                vmem_limit_bytes=64 * 1024 * 1024),
        )(h, *weights, self.norm_w, self.norm_b)

    # -------------------------- random masking (glue) --------------------------
    @staticmethod
    def random_masking(sequence, mask_ratio, noise):
        B, L, D = sequence.shape
        len_keep = int(L * (1 - mask_ratio))
        ids_shuffle = jnp.argsort(noise, axis=1)
        ids_restore = jnp.argsort(ids_shuffle, axis=1)
        ids_keep = ids_shuffle[:, :len_keep]
        seq_unmasked = jnp.take_along_axis(sequence, ids_keep[:, :, None], axis=1)
        mask = jnp.ones((B, L), jnp.float32).at[:, :len_keep].set(0.0)
        mask = jnp.take_along_axis(mask, ids_restore, axis=1)
        return seq_unmasked, mask, ids_restore

    # ----------------------------------- forward -----------------------------------
    def __call__(self, x, mask_ratio=0.75, noise=None):
        # x: (B, C, T, H, W) float32  (matches self.input_size, so the buffered pos_embed is used)
        assert x.shape[-3:] == self.input_size
        B = x.shape[0]

        tok = self._patch_embed(x)                              # (B, L, D)
        tok = tok + self.pos_embed[:, 1:, :]

        # TODO(synk): temporal/location coordinate encoders are not instantiated because
        # coords_encoding=None (the module default); forward skips them in that case.

        if noise is None:
            # NOTE: fixed key => identical mask every call; pass `noise` for real use.
            noise = jax.random.uniform(jax.random.PRNGKey(42), (B, tok.shape[1]), jnp.float32)
        tok, mask, ids_restore = self.random_masking(tok, mask_ratio, noise)

        cls_tok = self.cls_token + self.pos_embed[:, :1, :]     # (1, 1, D)
        cls_tok = jnp.broadcast_to(cls_tok, (B, 1, self.embed_dim))
        h = jnp.concatenate([cls_tok, tok], axis=1)             # (B, 1+len_keep, D)

        # TODO(synk): at real Prithvi scale (S~790, D=1024) the fused stack should also
        # row/flash-tile the sequence axis; at this toy S (=5 < 8 sublanes) a sequence
        # tile cannot satisfy the (8,128) block constraint without padding, so the full
        # sequence is kept per block.
        h = self._run_encoder(h)                                # depth blocks + final LN fused
        return h, mask, ids_restore


# ----------------------------------------- main -----------------------------------------
if __name__ == "__main__":
    key = jax.random.PRNGKey(0)
    k_param, k_x, k_noise = jax.random.split(key, 3)

    # small config: img 16x16, patch (1,4,4) -> 16 patches, embed 32, 2 blocks, 4 heads
    model = PrithviViTPallas(img_size=16, patch_size=(1, 4, 4), num_frames=1, in_chans=4,
                             embed_dim=32, depth=2, num_heads=4, mlp_ratio=4.0, key=k_param)

    x = jax.random.normal(k_x, (2, 4, 1, 16, 16), jnp.float32)          # (B, C, T, H, W)
    noise = jax.random.uniform(k_noise, (2, model.num_patches), jnp.float32)

    out, mask, ids_restore = model(x, mask_ratio=0.75, noise=noise)
    jax.block_until_ready((out, mask, ids_restore))

    assert out.shape == (2, 1 + int(model.num_patches * 0.25), 32)
    assert mask.shape == (2, model.num_patches)
    assert ids_restore.shape == (2, model.num_patches)
    assert bool(jnp.all(jnp.isfinite(out)))
    print("KERNEL_OK")
</pallas_src>

<mosaic_0001>
module attributes {stable_mosaic.version = 11 : i64} {
  func.func @_patch_embed_kernel(%arg0: i32, %arg1: memref<32x64xf32, #tpu.memory_space<vmem>>, %arg2: memref<64x32xbf16, #tpu.memory_space<vmem>>, %arg3: memref<1x32xf32, #tpu.memory_space<vmem>>, %arg4: memref<32x32xf32, #tpu.memory_space<vmem>>) attributes {dimension_semantics = [#tpu.dimension_semantics<parallel>], iteration_bounds = array<i64: 1>, scalar_prefetch = 0 : i64, scratch_operands = 0 : i64, tpu.core_type = #tpu.core_type<tc>, window_params = [{transform_indices = @transform_0, window_bounds = array<i64: 32, 64>}, {pipeline_mode = #tpu.pipeline_mode<synchronous>, transform_indices = @transform_1, window_bounds = array<i64: 64, 32>}, {pipeline_mode = #tpu.pipeline_mode<synchronous>, transform_indices = @transform_2, window_bounds = array<i64: 1, 32>}, {transform_indices = @transform_3, window_bounds = array<i64: 32, 32>}]} {
    %c0 = arith.constant 0 : index
    %c0_0 = arith.constant 0 : index
    %0 = vector.load %arg1[%c0, %c0_0] : memref<32x64xf32, #tpu.memory_space<vmem>>, vector<32x64xf32>
    %1 = arith.truncf %0 : vector<32x64xf32> to vector<32x64xbf16>
    %c0_1 = arith.constant 0 : index
    %c0_2 = arith.constant 0 : index
    %2 = vector.load %arg2[%c0_1, %c0_2] : memref<64x32xbf16, #tpu.memory_space<vmem>>, vector<64x32xbf16>
    %cst = arith.constant dense<0.000000e+00> : vector<32x32xf32>
    %3 = tpu.matmul %1, %2, %cst {dimension_numbers = #tpu.dot_dimension_numbers<[1], [0], [0], [1], [0, 0, 1, 1], [], []>} : vector<32x64xbf16>, vector<64x32xbf16>, vector<32x32xf32> -> vector<32x32xf32>
    %c0_3 = arith.constant 0 : index
    %c0_4 = arith.constant 0 : index
    %4 = vector.load %arg3[%c0_3, %c0_4] : memref<1x32xf32, #tpu.memory_space<vmem>>, vector<1x32xf32>
    %5 = vector.broadcast %4 : vector<1x32xf32> to vector<32x32xf32>
    %6 = arith.addf %3, %5 : vector<32x32xf32>
    %c0_5 = arith.constant 0 : index
    %c0_6 = arith.constant 0 : index
    %7 = vector.load %arg4[%c0_5, %c0_6] : memref<32x32xf32, #tpu.memory_space<vmem>>, vector<32x32xf32>
    tpu.vector_store %arg4[%c0_5, %c0_6], %6 {strides = array<i32>} : memref<32x32xf32, #tpu.memory_space<vmem>>, vector<32x32xf32>,
    return
  }
  func.func @transform_0(%arg0: i32) -> (i32, i32) {
    %c0_i32 = arith.constant 0 : i32
    %c0_i32_0 = arith.constant 0 : i32
    return %arg0, %c0_i32 : i32, i32
  }
  func.func @transform_1(%arg0: i32) -> (i32, i32) {
    %c0_i32 = arith.constant 0 : i32
    %c0_i32_0 = arith.constant 0 : i32
    %c0_i32_1 = arith.constant 0 : i32
    return %c0_i32, %c0_i32_0 : i32, i32
  }
  func.func @transform_2(%arg0: i32) -> (i32, i32) {
    %c0_i32 = arith.constant 0 : i32
    %c0_i32_0 = arith.constant 0 : i32
    %c0_i32_1 = arith.constant 0 : i32
    return %c0_i32, %c0_i32_0 : i32, i32
  }
  func.func @transform_3(%arg0: i32) -> (i32, i32) {
    %c0_i32 = arith.constant 0 : i32
    %c0_i32_0 = arith.constant 0 : i32
    return %arg0, %c0_i32 : i32, i32
  }
}

</mosaic_0001>

<llo_original>
// kernel: tpu_custom_call.1
$region0: #{tpu_custom_call.1}
  #allocation0 [shape = 'u32[]', space=smem, size = 0x4, offset = 0x4, fixed_abs, tag = 'smem constant byte address 0x4 - core index']
  #allocation1 [shape = 'u32[72,128]{1,0:T(1,128)}', space=vmem, size = 0x9000, scoped, tag = 'internal scratch']
  %s0 = inlined_call_operand.vmem [shape: f32[32,64], index: 0, kind: input, shape index: {}]
  %s1 = inlined_call_operand.vmem [shape: bf16[64,32], index: 1, kind: input, shape index: {}]
  %s2 = inlined_call_operand.vmem [shape: f32[1,32], index: 2, kind: input, shape index: {}]
  %s3 = inlined_call_operand.hbm [shape: f32[32,32], index: 3, kind: output, shape index: {}]
  %s4 = sld [smem:[#allocation0]]
  $region22: #{tpu_custom_call.1} parent=0
    _
  %s6 = ssub.s32 1, %s4
  %s7 = scalar_select 0, %s6, %s4
  $region1: #{tpu_custom_call.1} parent=0
    #allocation2 [shape = 'u8[16384]{0}', space=vmem, size = 0x4000, scoped, tag = 'output window, operand 0, single buffered']
    #allocation3 [shape = 's32[1]{0}', space=sflag, size = 0x4, scoped, tag = 'scoped memory for tpu_custom_call.1']
    %8 = vsyncpa [#allocation3], 0
    // Predicated region
    $region2: #{tpu_custom_call.1} parent=1 // pred_check
      _
    $region3: #{tpu_custom_call.1} parent=1 // pred_check_branch
      %10 = sbr.rel (0) target = $region5
    $region4: #{tpu_custom_call.1} parent=1 // pred_region
      _
    $region5: #{tpu_custom_call.1} parent=1 // pred_fallthru
      _
    // Predicated region
    $region6: #{tpu_custom_call.1} parent=1 // pred_check
      _
    $region7: #{tpu_custom_call.1} parent=1 // pred_check_branch
      %12 = sbr.rel (0) target = $region9
    $region8: #{tpu_custom_call.1} parent=1 // pred_region
      _
    $region9: #{tpu_custom_call.1} parent=1 // pred_fallthru
      _
    // Predicated region
    $region10: #{tpu_custom_call.1} parent=1 // pred_check
      _
    $region11: #{tpu_custom_call.1} parent=1 // pred_check_branch
      %14 = sbr.rel (0) target = $region13
    $region12: #{tpu_custom_call.1} parent=1 // pred_region
      _
    $region13: #{tpu_custom_call.1} parent=1 // pred_fallthru
      _
    %v16 = vld [vmem:[%s0] sm:$0xff]
    %v17 = vld [vmem:[%s0 + $0x8] sm:$0xff]
    %v18 = vld [vmem:[%s0 + $0x10] sm:$0xff]
    %v19 = vld [vmem:[%s0 + $0x18] sm:$0xff]
    %v20 = vpack.c.bf16 %v17, %v16
    %v21 = vpack.c.bf16 %v19, %v18
    %v22 = vld [vmem:[%s1] sm:$0xf]
    %v23 = vld [vmem:[%s1 + $0x4] sm:$0xf]
    %v24 = vld [vmem:[%s1 + $0x8] sm:$0xf]
    %v25 = vld [vmem:[%s1 + $0xc] sm:$0xf]
    %v26 = vld [vmem:[%s1 + $0x10] sm:$0xf]
    %v27 = vld [vmem:[%s1 + $0x14] sm:$0xf]
    %v28 = vld [vmem:[%s1 + $0x18] sm:$0xf]
    %v29 = vld [vmem:[%s1 + $0x1c] sm:$0xf]
    %v30 = vld [vmem:[%s2] sm:$0x1]
    %v32 = vperm.slane %v30, 0
    %v42 = vunpack.c.l.b16 %v22
    %v43 = vunpack.c.l.b16 %v23
    %v44 = vunpack.c.l.b16 %v24
    %v45 = vunpack.c.l.b16 %v25
    %v46 = vunpack.c.l.b16 %v26
    %v47 = vunpack.c.l.b16 %v27
    %v48 = vunpack.c.l.b16 %v28
    %v49 = vunpack.c.l.b16 %v29
    %v50 = vpack.c.b16 %v43, %v42
    %v51 = vpack.c.b16 %v45, %v44
    %v52 = vpack.c.b16 %v47, %v46
    %v53 = vpack.c.b16 %v49, %v48
    %vm58 = vcmask 523264
    %v60 = vsel %vm58, %v20, 0
    %v63 = vsel %vm58, %v21, 0
    %65 = vmatpush.bf16.msra.mxu0 0
    %66 = vmatpush.bf16.msra.mxu0 0
    %67 = vmatpush.bf16.msra.mxu0 0
    %68 = vmatpush.bf16.msra.mxu0 0
    %69 = vmatpush.bf16.msra.mxu0 %v53
    %70 = vmatpush.bf16.msra.mxu0 %v52
    %71 = vmatpush.bf16.msra.mxu0 %v51
    %72 = vmatpush.bf16.msra.mxu0 %v50
    %73 = vmatmul.bf16.gmra.mxu0 %v60
    %v74 = vpop.f32.mrf.mxu0
    %v75 = vadd.f32 %v32, %v74
    %v76 = vpop.f32.mrf.mxu0
    %v77 = vadd.f32 %v32, %v76
    %78 = vmatmul.bf16.gmra.mxu0 %v63
    %v79 = vpop.f32.mrf.mxu0
    %v80 = vadd.f32 %v32, %v79
    %v81 = vpop.f32.mrf.mxu0
    %v82 = vadd.f32 %v32, %v81
    %83 = vdwg.mxu0
    %vm84 = vcmask 261120
    %85 = vst.msk [vmem:[#allocation2] sm:$0xff] %vm84, %v75
    %86 = vst.msk [vmem:[#allocation2 + $0x8] sm:$0xff] %vm84, %v77
    %87 = vst.msk [vmem:[#allocation2 + $0x10] sm:$0xff] %vm84, %v80
    %88 = vst.msk [vmem:[#allocation2 + $0x18] sm:$0xff] %vm84, %v82
    // Predicated region
    $region14: #{tpu_custom_call.1} parent=1 // pred_check
      _
    $region15: #{tpu_custom_call.1} parent=1 // pred_check_branch
      %90 = sbr.rel (0) target = $region17
    $region16: #{tpu_custom_call.1} parent=1 // pred_region
      %92 = vsyncadd [#allocation3], 0
      %s93 = sshll.u32 [#allocation2], 4
      %s94 = int_to_ptr.vmem [resolvable:$true] %s93
      %s95 = sshll.u32 %s3, 4
      %s96 = int_to_ptr.hbm [resolvable:$true] %s95
      %101 = dma.vmem_to_hbm [thread:$0]  %s94, 512, %s96, [#allocation3], 128, 128, 8
    $region17: #{tpu_custom_call.1} parent=1 // pred_fallthru
      _
    // Predicated region
    $region18: #{tpu_custom_call.1} parent=1 // pred_check
      _
    $region19: #{tpu_custom_call.1} parent=1 // pred_check_branch
      %103 = sbr.rel (0) target = $region21
    $region20: #{tpu_custom_call.1} parent=1 // pred_region
      %105 = dma.done [#allocation3], 512
    $region21: #{tpu_custom_call.1} parent=1 // pred_fallthru
      _
    %106 = vsyncpa [#allocation3], 1

</llo_original>
